<compile_context>
chip_gen: v5e
topology: v5e:2x2
jax: 0.10.0
libtpu: 0.0.40
codegen_flags: <defaults>
</compile_context>

<pallas_src>
import functools

import jax
import jax.numpy as jnp
from jax import lax
from jax.experimental import pallas as pl
from jax.experimental.pallas import tpu as pltpu


# ----------------------------------------------------------------------------
# Planning helpers
# ----------------------------------------------------------------------------
def _round_up(x, m):
    return ((x + m - 1) // m) * m


def _cdiv(a, b):
    return -(-a // b)


def _vmem_plan():
    """Per-generation (limit, working-set budget) in bytes."""
    try:
        cap = int(getattr(pltpu.get_tpu_info(), "vmem_capacity_bytes"))
    except Exception:
        cap = 64 * 1024 * 1024                      # conservative (v7x per core)
    limit = min(cap * 3 // 4, 96 * 1024 * 1024)      # 96 MiB on v5e/v6e, 48 MiB on v7x
    limit = max(limit, 32 * 1024 * 1024)
    budget = limit // 2                              # BlockSpec double-buffers inputs
    return int(limit), int(budget)


def _plan(x):
    """Tiling plan for NCHW feature tensor x."""
    a, b, c, d = x.shape
    m, k = a * b, c * d
    itemsize = jnp.dtype(x.dtype).itemsize
    limit, budget = _vmem_plan()

    m_pad = _round_up(max(m, 1), 8)                  # sublane alignment only
    n128 = _cdiv(max(k, 1), 128)                     # K in 128-column blocks

    # Per-core VMEM: resident (m_pad, m_pad) f32 Gram slab (x2 headroom) plus a
    # double-buffered (m_pad, 128*t) feature tile.
    fixed = 2 * m_pad * m_pad * 4
    per_block = 2 * m_pad * 128 * itemsize
    avail = budget - fixed
    if avail < per_block:
        # TODO(synk): tile the Gram output with an (i, j, k) grid for huge a*b.
        raise NotImplementedError(
            "StyleLoss Pallas kernel: a*b too large for a resident Gram block")
    t_budget = max(1, avail // per_block)            # tk in units of 128 columns

    # Minimum reduction depth so feature DMA overlaps MXU compute.
    if n128 >= 16:
        min_depth = 4
    elif n128 >= 2:
        min_depth = 2
    else:
        min_depth = 1
    nk = max(_cdiv(n128, t_budget), min_depth)

    # Split the K reduction across 2 TensorCores on megacore/v7x chips; on
    # single-core chips the extra "parallel" axis is just a cheap serial loop.
    ncores = 2 if nk >= 2 else 1
    nk = _round_up(nk, ncores)

    t = _cdiv(n128, nk)
    tk = t * 128
    k_pad = nk * tk                                  # waste bounded by ~128*nk cols

    return dict(m=m, k=k, m_pad=m_pad, k_pad=k_pad, tk=tk, nk=nk,
                ncores=ncores, vmem_limit=limit)


def _features(x, plan):
    """NCHW -> (m_pad, k_pad) features, padding only the small remainders."""
    a, b, c, d = x.shape
    m, k = a * b, c * d
    feats = x.reshape(m, k)                          # contiguous reshape: no copy
    dm, dk = plan["m_pad"] - m, plan["k_pad"] - k
    if dm or dk:
        feats = jnp.pad(feats, ((0, dm), (0, dk)))   # small remainder only
    return feats


# ----------------------------------------------------------------------------
# Kernels
# ----------------------------------------------------------------------------
def _gram_partial_kernel(feat_ref, part_ref, *, inv_norm):
    """Per-core partial Gram: accumulate F_k @ F_k.T directly into the output."""
    kk = pl.program_id(1)

    @pl.when(kk == 0)
    def _():
        part_ref[...] = jnp.zeros_like(part_ref)

    f = feat_ref[...]
    # Contract axis 1 of both operands -> F @ F.T on the MXU (no transpose copy).
    part_ref[...] += lax.dot_general(
        f, f,
        dimension_numbers=(((1,), (1,)), ((), ())),
        preferred_element_type=jnp.float32)

    @pl.when(kk == pl.num_programs(1) - 1)
    def _():
        part_ref[...] *= inv_norm


def _loss_kernel(part_ref, target_ref, gram_ref, loss_ref, *, inv_mm):
    """Tiny epilogue: sum per-core partial Grams, store Gram, compute MSE."""
    g = part_ref[0]
    for i in range(1, part_ref.shape[0]):            # static unroll (ncores <= 2)
        g = g + part_ref[i]
    gram_ref[...] = g
    diff = g - target_ref[...]
    loss_ref[0, 0] = jnp.sum(diff * diff) * inv_mm


# ----------------------------------------------------------------------------
# pallas_call wrappers
# ----------------------------------------------------------------------------
def _partial_grams(feats, plan):
    """Streaming kernel: (ncores, m_pad, m_pad) scaled partial Grams."""
    m_pad, k_pad, tk = plan["m_pad"], plan["k_pad"], plan["tk"]
    nk, ncores = plan["nk"], plan["ncores"]
    nk_per_core = nk // ncores
    inv_norm = 1.0 / float(plan["m"] * plan["k"])

    cost = pl.CostEstimate(
        flops=int(2 * m_pad * m_pad * k_pad),
        transcendentals=0,
        bytes_accessed=int(m_pad * k_pad * jnp.dtype(feats.dtype).itemsize
                           + ncores * m_pad * m_pad * 4))

    return pl.pallas_call(
        functools.partial(_gram_partial_kernel, inv_norm=inv_norm),
        out_shape=jax.ShapeDtypeStruct((ncores, m_pad, m_pad), jnp.float32),
        grid_spec=pltpu.PrefetchScalarGridSpec(
            num_scalar_prefetch=0,
            grid=(ncores, nk_per_core),
            in_specs=[pl.BlockSpec(
                (m_pad, tk), lambda c, kk: (0, c * nk_per_core + kk))],
            out_specs=pl.BlockSpec(
                (None, m_pad, m_pad), lambda c, kk: (c, 0, 0))),
        compiler_params=pltpu.CompilerParams(
            dimension_semantics=("parallel", "arbitrary"),
            vmem_limit_bytes=plan["vmem_limit"]),
        cost_estimate=cost,
    )(feats)


def _combine(parts, plan):
    """Sum per-core partial Grams (tiny, plain-JAX epilogue)."""
    return parts[0] if plan["ncores"] == 1 else jnp.sum(parts, axis=0)


def _loss_epilogue(parts, target_padded, plan):
    """Pallas epilogue: Gram of x (padded) + scalar MSE against cached target."""
    m_pad = plan["m_pad"]
    inv_mm = 1.0 / float(plan["m"] * plan["m"])
    return pl.pallas_call(
        functools.partial(_loss_kernel, inv_mm=inv_mm),
        out_shape=(jax.ShapeDtypeStruct((m_pad, m_pad), jnp.float32),
                   jax.ShapeDtypeStruct((1, 1), jnp.float32)),
        in_specs=[pl.BlockSpec(memory_space=pltpu.MemorySpace.VMEM),
                  pl.BlockSpec(memory_space=pltpu.MemorySpace.VMEM)],
        out_specs=(pl.BlockSpec(memory_space=pltpu.MemorySpace.VMEM),
                   pl.BlockSpec(memory_space=pltpu.MemorySpace.SMEM)),
    )(parts, target_padded)


def gram_matrix_pallas(x):
    """Pallas equivalent of torch gram_matrix for NCHW input x (unpadded (m, m))."""
    plan = _plan(x)
    feats = _features(x, plan)
    gram_pad = _combine(_partial_grams(feats, plan), plan)
    return gram_pad[:plan["m"], :plan["m"]]


# ----------------------------------------------------------------------------
# Module
# ----------------------------------------------------------------------------
class StyleLoss:
    """JAX/Pallas port of the PyTorch StyleLoss module."""

    def __init__(self, target_feature):
        self._shape = tuple(target_feature.shape)
        self._plan = _plan(target_feature)
        feats = _features(target_feature, self._plan)
        tgt_pad = _combine(_partial_grams(feats, self._plan), self._plan)
        # Cached padded target Gram ("detached"); padded rows/cols are zero.
        self._target_padded = lax.stop_gradient(tgt_pad)
        self.target = self._target_padded[:self._plan["m"], :self._plan["m"]]
        self.loss = None
        self.gram = None

    def __call__(self, x):
        if tuple(x.shape) != self._shape:
            raise ValueError("StyleLoss expects input shaped like the target feature")
        plan = self._plan
        feats = _features(x, plan)
        parts = _partial_grams(feats, plan)
        gram_pad, loss = _loss_epilogue(parts, self._target_padded, plan)
        self.gram = gram_pad[:plan["m"], :plan["m"]]
        self.loss = loss[0, 0]
        return x                                     # identity pass-through


# ----------------------------------------------------------------------------
# Demo / self-check
# ----------------------------------------------------------------------------
if __name__ == "__main__":
    key = jax.random.PRNGKey(0)
    k_t, k_x = jax.random.split(key)

    # Small NCHW feature maps consistent with the module.
    target_feature = jax.random.normal(k_t, (2, 4, 16, 16), dtype=jnp.float32)
    x = jax.random.normal(k_x, (2, 4, 16, 16), dtype=jnp.float32)

    module = StyleLoss(target_feature)
    out = module(x)
    out = jax.block_until_ready(out)
    loss = jax.block_until_ready(module.loss)
    gram = jax.block_until_ready(module.gram)

    # Pure-JAX reference.
    def gram_ref(v):
        a, b, c, d = v.shape
        f = v.reshape(a * b, c * d).astype(jnp.float32)
        return (f @ f.T) / (a * b * c * d)

    g_ref = gram_ref(x)
    t_ref = gram_ref(target_feature)
    loss_ref = jnp.mean((g_ref - t_ref) ** 2)

    assert out.shape == x.shape and jnp.allclose(out, x)
    assert jnp.allclose(module.target, t_ref, rtol=1e-5, atol=1e-5)
    assert jnp.allclose(gram, g_ref, rtol=1e-5, atol=1e-5)
    assert jnp.allclose(loss, loss_ref, rtol=1e-5, atol=1e-6)

    print("KERNEL_OK")
</pallas_src>

<mosaic_0001>
module attributes {stable_mosaic.version = 11 : i64} {
  func.func @_gram_partial_kernel(%arg0: i32, %arg1: i32, %arg2: memref<8x128xf32, #tpu.memory_space<vmem>>, %arg3: memref<1x8x8xf32, #tpu.memory_space<vmem>>) attributes {dimension_semantics = [#tpu.dimension_semantics<parallel>, #tpu.dimension_semantics<arbitrary>], iteration_bounds = array<i64: 2, 1>, scalar_prefetch = 0 : i64, scratch_operands = 0 : i64, tpu.core_type = #tpu.core_type<tc>, window_params = [{transform_indices = @transform_0, window_bounds = array<i64: 8, 128>}, {transform_indices = @transform_1, window_bounds = array<i64: 1, 8, 8>}]} {
    %c0_i32 = arith.constant 0 : i32
    %0 = arith.cmpi eq, %arg1, %c0_i32 : i32
    %1 = arith.extui %0 : i1 to i32
    %c0_i32_0 = arith.constant 0 : i32
    %2 = arith.cmpi ne, %1, %c0_i32_0 : i32
    scf.if %2 {
      %cst_10 = arith.constant 0.000000e+00 : f32
      %14 = vector.broadcast %cst_10 : f32 to vector<8x8xf32>
      %c0_11 = arith.constant 0 : index
      %c0_12 = arith.constant 0 : index
      %c0_13 = arith.constant 0 : index
      %15 = vector.load %arg3[%c0_11, %c0_12, %c0_13] : memref<1x8x8xf32, #tpu.memory_space<vmem>>, vector<1x8x8xf32>
      %16 = vector.shape_cast %15 : vector<1x8x8xf32> to vector<8x8xf32>
      %17 = vector.shape_cast %14 : vector<8x8xf32> to vector<1x8x8xf32>
      tpu.vector_store %arg3[%c0_11, %c0_12, %c0_13], %17 {strides = array<i32>} : memref<1x8x8xf32, #tpu.memory_space<vmem>>, vector<1x8x8xf32>,
    } else {
    }
    %c0 = arith.constant 0 : index
    %c0_1 = arith.constant 0 : index
    %3 = vector.load %arg2[%c0, %c0_1] : memref<8x128xf32, #tpu.memory_space<vmem>>, vector<8x128xf32>
    %c0_2 = arith.constant 0 : index
    %c0_3 = arith.constant 0 : index
    %c0_4 = arith.constant 0 : index
    %4 = vector.load %arg3[%c0_2, %c0_3, %c0_4] : memref<1x8x8xf32, #tpu.memory_space<vmem>>, vector<1x8x8xf32>
    %5 = vector.shape_cast %4 : vector<1x8x8xf32> to vector<8x8xf32>
    %cst = arith.constant dense<0.000000e+00> : vector<8x8xf32>
    %6 = tpu.matmul %3, %3, %cst {dimension_numbers = #tpu.dot_dimension_numbers<[1], [1], [0], [0], [0, 0, 1, 0], [], []>} : vector<8x128xf32>, vector<8x128xf32>, vector<8x8xf32> -> vector<8x8xf32>
    %7 = arith.addf %5, %6 : vector<8x8xf32>
    %c0_5 = arith.constant 0 : index
    %c0_6 = arith.constant 0 : index
    %c0_7 = arith.constant 0 : index
    %8 = vector.load %arg3[%c0_5, %c0_6, %c0_7] : memref<1x8x8xf32, #tpu.memory_space<vmem>>, vector<1x8x8xf32>
    %9 = vector.shape_cast %8 : vector<1x8x8xf32> to vector<8x8xf32>
    %10 = vector.shape_cast %7 : vector<8x8xf32> to vector<1x8x8xf32>
    tpu.vector_store %arg3[%c0_5, %c0_6, %c0_7], %10 {strides = array<i32>} : memref<1x8x8xf32, #tpu.memory_space<vmem>>, vector<1x8x8xf32>,
    %c0_i32_8 = arith.constant 0 : i32
    %11 = arith.cmpi eq, %arg1, %c0_i32_8 : i32
    %12 = arith.extui %11 : i1 to i32
    %c0_i32_9 = arith.constant 0 : i32
    %13 = arith.cmpi ne, %12, %c0_i32_9 : i32
    scf.if %13 {
      %c0_10 = arith.constant 0 : index
      %c0_11 = arith.constant 0 : index
      %c0_12 = arith.constant 0 : index
      %14 = vector.load %arg3[%c0_10, %c0_11, %c0_12] : memref<1x8x8xf32, #tpu.memory_space<vmem>>, vector<1x8x8xf32>
      %15 = vector.shape_cast %14 : vector<1x8x8xf32> to vector<8x8xf32>
      %cst_13 = arith.constant 4.8828125E-4 : f32
      %16 = vector.broadcast %cst_13 : f32 to vector<8x8xf32>
      %17 = arith.mulf %15, %16 : vector<8x8xf32>
      %c0_14 = arith.constant 0 : index
      %c0_15 = arith.constant 0 : index
      %c0_16 = arith.constant 0 : index
      %18 = vector.load %arg3[%c0_14, %c0_15, %c0_16] : memref<1x8x8xf32, #tpu.memory_space<vmem>>, vector<1x8x8xf32>
      %19 = vector.shape_cast %18 : vector<1x8x8xf32> to vector<8x8xf32>
      %20 = vector.shape_cast %17 : vector<8x8xf32> to vector<1x8x8xf32>
      tpu.vector_store %arg3[%c0_14, %c0_15, %c0_16], %20 {strides = array<i32>} : memref<1x8x8xf32, #tpu.memory_space<vmem>>, vector<1x8x8xf32>,
    } else {
    }
    return
  }
  func.func @transform_0(%arg0: i32, %arg1: i32) -> (i32, i32) {
    %c1_i32 = arith.constant 1 : i32
    %0 = arith.muli %arg0, %c1_i32 : i32
    %1 = arith.addi %0, %arg1 : i32
    %c0_i32 = arith.constant 0 : i32
    %c0_i32_0 = arith.constant 0 : i32
    return %c0_i32, %1 : i32, i32
  }
  func.func @transform_1(%arg0: i32, %arg1: i32) -> (i32, i32, i32) {
    %c0_i32 = arith.constant 0 : i32
    %c0_i32_0 = arith.constant 0 : i32
    %c0_i32_1 = arith.constant 0 : i32
    return %arg0, %c0_i32, %c0_i32_0 : i32, i32, i32
  }
}

</mosaic_0001>

<llo_original>
// kernel: tpu_custom_call.1
$region0: #{tpu_custom_call.1}
  #allocation0 [shape = 'u32[]', space=smem, size = 0x4, offset = 0x4, fixed_abs, tag = 'smem constant byte address 0x4 - core index']
  #allocation1 [shape = 'u32[72,128]{1,0:T(1,128)}', space=vmem, size = 0x9000, scoped, tag = 'internal scratch']
  %s0 = inlined_call_operand.hbm [shape: f32[8,256], index: 0, kind: input, shape index: {}]
  %s1 = inlined_call_operand.hbm [shape: f32[2,8,8], index: 1, kind: output, shape index: {}]
  %s2 = sld [smem:[#allocation0]]
  $region49: #{tpu_custom_call.1} parent=0
    _
  %s4 = ssub.s32 1, %s2
  %s5 = scalar_select 0, %s4, %s2
  $region1: #{tpu_custom_call.1} parent=0
    #allocation2 [shape = 'u8[8192]{0}', space=vmem, size = 0x2000, scoped, tag = 'input window, operand 0']
    #allocation3 [shape = 's32[2]{0}', space=sflag, size = 0x8, scoped, tag = 'scoped memory for tpu_custom_call.1']
    #allocation4 [shape = 's32[2]{0}', space=sflag, size = 0x8, scoped, tag = 'scoped memory for tpu_custom_call.1']
    #allocation5 [shape = 'u8[8192]{0}', space=vmem, size = 0x2000, scoped, tag = 'output window, operand 0']
    %6 = vsyncpa [#allocation3], 0
    %s7 = scalar_lea.sflag [#allocation3], 1
    %8 = vsyncpa %s7, 0
    %9 = vsyncpa [#allocation4], 0
    %s10 = scalar_lea.sflag [#allocation4], 1
    %11 = vsyncpa %s10, 0
    loop: start=0, step=1, limit=4
    $region2: #{tpu_custom_call.1} parent=1 // loop_pre_header
      _
    $region3: #{tpu_custom_call.1} parent=1 // loop_header
      %s13 = sphi 0, %s17
      %p14 = scmp.ge.s32.totalorder %s13, 4
      %s20 = sphi 0, %s32
      %s21 = sphi 0, %s28
      %s22 = sphi 0, %s20
      %s23 = sphi 0, %s21
      %s24 = sphi 0, %s22
      %s25 = sphi 0, %s23
      %s37 = sphi 0, %s39
      %s40 = sphi 0, %s37
      %s41 = sphi 0, %s40
      %s57 = sphi 0, %s41
      %s63 = sphi 0, %s65
      %s66 = sphi 0, %s63
      %s67 = sphi 0, %s66
      %s83 = sphi 0, %s67
    $region4: #{tpu_custom_call.1} parent=1 // loop_header_branch
      %16 = sbr.rel (%p14) target = $region8
    $region5: #{tpu_custom_call.1} parent=1 // loop_body
      %s18 = ssub.s32 %s13, 1
      %s19 = ssub.s32 %s13, 2
      %s26 = sadd.s32 1, %s21
      %p27 = scmp.ge.s32.totalorder %s26, 1
      %s28 = scalar_select %p27, 0, %s26
      %s29 = sadd.s32 1, %s20
      %s30 = scalar_select %p27, %s29, %s20
      %p31 = scmp.ge.s32.totalorder %s30, 2
      %s32 = scalar_select %p31, 0, %s30
      %s33 = sadd.s32 %s20, %s21
      %s34 = sadd.s32 %s32, %s28
      %s35 = ssub.s32 %s33, %s34
      %p36 = scmp.eq.s32.totalorder %s35, 0
      %s38 = sadd.s32 %s37, 1
      %s39 = scalar_select %p36, %s37, %s38
      %p42 = pneg %p36
      %p43 = scmp.eq.s32.totalorder %s13, 1
      %p44 = por %p42, %p43
      %p45 = scmp.ne.s32.totalorder %s37, %s40
      %p46 = scmp.eq.s32.totalorder %s13, 0
      %p47 = por %p45, %p46
      %p48 = scmp.ne.s32.totalorder %s37, %s40
      %p49 = scmp.eq.s32.totalorder %s18, 1
      %p50 = por %p48, %p49
      %p51 = scmp.ne.s32.totalorder %s40, %s41
      %p52 = scmp.eq.s32.totalorder %s18, 0
      %p53 = por %p51, %p52
      %p54 = scmp.ne.s32.totalorder %s40, %s41
      %p55 = scmp.eq.s32.totalorder %s19, 1
      %p56 = por %p54, %p55
      %p58 = scmp.ne.s32.totalorder %s41, %s57
      %p59 = scmp.eq.s32.totalorder %s19, 0
      %p60 = por %p58, %p59
      %s61 = ssub.s32 %s20, %s32
      %p62 = scmp.eq.s32.totalorder %s61, 0
      %s64 = sadd.s32 %s63, 1
      %s65 = scalar_select %p62, %s63, %s64
      %p68 = pneg %p62
      %p69 = scmp.eq.s32.totalorder %s13, 1
      %p70 = por %p68, %p69
      %p71 = scmp.ne.s32.totalorder %s63, %s66
      %p72 = scmp.eq.s32.totalorder %s13, 0
      %p73 = por %p71, %p72
      %p74 = scmp.ne.s32.totalorder %s63, %s66
      %p75 = scmp.eq.s32.totalorder %s18, 1
      %p76 = por %p74, %p75
      %p77 = scmp.ne.s32.totalorder %s66, %s67
      %p78 = scmp.eq.s32.totalorder %s18, 0
      %p79 = por %p77, %p78
      %p80 = scmp.ne.s32.totalorder %s66, %s67
      %p81 = scmp.eq.s32.totalorder %s19, 1
      %p82 = por %p80, %p81
      %p84 = scmp.ne.s32.totalorder %s67, %s83
      %p85 = scmp.eq.s32.totalorder %s19, 0
      %p86 = por %p84, %p85
      %p87 = scmp.le.s32.totalorder 1, %s13
      %p88 = scmp.lt.s32.totalorder %s13, 3
      %p89 = pnand %p87, %p88
      %p90 = pneg %p89
      // Predicated region
      $region9: #{tpu_custom_call.1} parent=5 // pred_check
        _
      $region10: #{tpu_custom_call.1} parent=5 // pred_check_branch
        %92 = sbr.rel (%p89) target = $region12
      $region11: #{tpu_custom_call.1} parent=5 // pred_region
        %s93 = ssub.s32 %s13, 1
      $region12: #{tpu_custom_call.1} parent=5 // pred_fallthru
        _
      %p94 = scmp.lt.s32.totalorder %s13, 2
      // Predicated region
      $region13: #{tpu_custom_call.1} parent=5 // pred_check
        %p95 = pneg %p94
      $region14: #{tpu_custom_call.1} parent=5 // pred_check_branch
        %97 = sbr.rel (%p95) target = $region16
      $region15: #{tpu_custom_call.1} parent=5 // pred_region
        // Predicated region
        $region17: #{tpu_custom_call.1} parent=15 // pred_check
          %p98 = pneg %p47
        $region18: #{tpu_custom_call.1} parent=15 // pred_check_branch
          %100 = sbr.rel (%p98) target = $region20
        $region19: #{tpu_custom_call.1} parent=15 // pred_region
          %s101 = sand.u32 %s37, 1
          %s102 = scalar_lea.sflag [#allocation3], %s101
          %s103 = sand.u32 %s37, 1
          %s104 = smul.addr %s103, 8
          %s105 = scalar_lea.vmem [#allocation2], %s104
          %s106 = sadd.s32 %s20, %s21
          %108 = vsyncadd %s102, 0
          %s109 = smul.addr %s106, 8
          %s110 = scalar_lea.hbm %s0, %s109
          %s112 = sshll.u32 %s110, 4
          %s113 = int_to_ptr.hbm [resolvable:$true] %s112
          %s114 = sshll.u32 %s105, 4
          %s115 = int_to_ptr.vmem [resolvable:$true] %s114
          %117 = dma.hbm_to_vmem [thread:$0]  %s113, 128, %s115, %s102
        $region20: #{tpu_custom_call.1} parent=15 // pred_fallthru
          _
      $region16: #{tpu_custom_call.1} parent=5 // pred_fallthru
        _
      %p118 = scmp.le.s32.totalorder 1, %s13
      %p119 = scmp.lt.s32.totalorder %s13, 3
      %p120 = pnand %p118, %p119
      %p121 = pneg %p120
      // Predicated region
      $region21: #{tpu_custom_call.1} parent=5 // pred_check
        _
      $region22: #{tpu_custom_call.1} parent=5 // pred_check_branch
        %123 = sbr.rel (%p120) target = $region24
      $region23: #{tpu_custom_call.1} parent=5 // pred_region
        %s124 = ssub.s32 %s13, 1
        %s125 = sand.u32 %s40, 1
        %s126 = scalar_lea.sflag [#allocation3], %s125
        %s127 = sand.u32 %s40, 1
        %s128 = smul.addr %s127, 8
        %s129 = scalar_lea.vmem [#allocation2], %s128
        // Predicated region
        $region25: #{tpu_custom_call.1} parent=23 // pred_check
          %p130 = pneg %p53
        $region26: #{tpu_custom_call.1} parent=23 // pred_check_branch
          %132 = sbr.rel (%p130) target = $region28
        $region27: #{tpu_custom_call.1} parent=23 // pred_region
          %134 = dma.done %s126, 128
        $region28: #{tpu_custom_call.1} parent=23 // pred_fallthru
          _
        %s135 = sand.u32 %s40, 1
        %s136 = scalar_lea.sflag [#allocation3], %s135
        %s137 = sand.u32 %s40, 1
        %s138 = smul.addr %s137, 8
        %s139 = scalar_lea.vmem [#allocation2], %s138
        %p140 = pneg %p53
        %p141 = pneg %p50
        %p142 = pneg %p79
        %p143 = pneg %p76
        %s144 = sand.u32 %s66, 1
        %s145 = scalar_lea.sflag [#allocation4], %s144
        %s146 = sand.u32 %s66, 1
        %s147 = smul.addr %s146, 8
        %s148 = scalar_lea.vmem [#allocation5], %s147
        %s149 = sadd.s32 %s22, %s23
        %p150 = scmp.eq.s32.totalorder %s23, 0
        // Predicated region
        $region29: #{tpu_custom_call.1} parent=23 // pred_check
          %p151 = pneg %p150
        $region30: #{tpu_custom_call.1} parent=23 // pred_check_branch
          %153 = sbr.rel (%p151) target = $region32
        $region31: #{tpu_custom_call.1} parent=23 // pred_region
          %vm154 = vcmask 64512
          %155 = vst.msk [vmem:[%s148] sm:$0xff] %vm154, 0.0
        $region32: #{tpu_custom_call.1} parent=23 // pred_fallthru
          _
        %v156 = vld [vmem:[%s129] sm:$0xff]
        %v157 = vld [vmem:[%s148] sm:$0xff]
        %158 = vmatpush.xpose.msra.mxu0 0.0
        %159 = vmatpush.xpose.msra.mxu0 0.0
        %160 = vmatpush.xpose.msra.mxu0 0.0
        %161 = vmatpush.xpose.msra.mxu0 0.0
        %162 = vmatpush.xpose.msra.mxu0 0.0
        %163 = vmatpush.xpose.msra.mxu0 0.0
        %164 = vmatpush.xpose.msra.mxu0 0.0
        %165 = vmatpush.xpose.msra.mxu0 0.0
        %166 = vmatpush.xpose.msra.mxu0 0.0
        %167 = vmatpush.xpose.msra.mxu0 0.0
        %168 = vmatpush.xpose.msra.mxu0 0.0
        %169 = vmatpush.xpose.msra.mxu0 0.0
        %170 = vmatpush.xpose.msra.mxu0 0.0
        %171 = vmatpush.xpose.msra.mxu0 0.0
        %172 = vmatpush.xpose.msra.mxu0 0.0
        %173 = vmatpush.xpose.msra.mxu0 %v156
        %174 = vmatmul.f32.gmra.mxu0 %v156
        %v175 = vpop.f32.mrf.mxu0
        %v176 = vadd.f32 0.0, %v175
        %177 = vdwg.mxu0
        %v178 = vadd.f32 %v157, %v176
        %vm179 = vcmask 64512
        %180 = vst.msk [vmem:[%s148] sm:$0xff] %vm179, %v178
        // Predicated region
        $region33: #{tpu_custom_call.1} parent=23 // pred_check
          %p181 = pneg %p150
        $region34: #{tpu_custom_call.1} parent=23 // pred_check_branch
          %183 = sbr.rel (%p181) target = $region36
        $region35: #{tpu_custom_call.1} parent=23 // pred_region
          %v184 = vld [vmem:[%s148] sm:$0xff]
          %v185 = vmul.f32 %v184, 0.00048828125
          %186 = vst.msk [vmem:[%s148] sm:$0xff] %vm179, %v185
        $region36: #{tpu_custom_call.1} parent=23 // pred_fallthru
          _
        %s187 = sand.u32 %s66, 1
        %s188 = scalar_lea.sflag [#allocation4], %s187
        %s189 = sand.u32 %s66, 1
        %s190 = smul.addr %s189, 8
        %s191 = scalar_lea.vmem [#allocation5], %s190
        // Predicated region
        $region37: #{tpu_custom_call.1} parent=23 // pred_check
          %p192 = pneg %p76
        $region38: #{tpu_custom_call.1} parent=23 // pred_check_branch
          %194 = sbr.rel (%p192) target = $region40
        $region39: #{tpu_custom_call.1} parent=23 // pred_region
          %196 = vsyncadd %s188, 0
          %s197 = smul.addr %s22, 8
          %s198 = scalar_lea.hbm %s1, %s197
          %s200 = sshll.u32 %s191, 4
          %s201 = int_to_ptr.vmem [resolvable:$true] %s200
          %s202 = sshll.u32 %s198, 4
          %s203 = int_to_ptr.hbm [resolvable:$true] %s202
          %205 = dma.vmem_to_hbm [thread:$0]  %s201, 128, %s203, %s188
        $region40: #{tpu_custom_call.1} parent=23 // pred_fallthru
          _
      $region24: #{tpu_custom_call.1} parent=5 // pred_fallthru
        _
      %p206 = scmp.le.s32.totalorder 2, %s13
      // Predicated region
      $region41: #{tpu_custom_call.1} parent=5 // pred_check
        %p207 = pneg %p206
      $region42: #{tpu_custom_call.1} parent=5 // pred_check_branch
        %209 = sbr.rel (%p207) target = $region44
      $region43: #{tpu_custom_call.1} parent=5 // pred_region
        %s210 = ssub.s32 %s13, 2
        // Predicated region
        $region45: #{tpu_custom_call.1} parent=43 // pred_check
          %p211 = pneg %p82
        $region46: #{tpu_custom_call.1} parent=43 // pred_check_branch
          %213 = sbr.rel (%p211) target = $region48
        $region47: #{tpu_custom_call.1} parent=43 // pred_region
          %s214 = sand.u32 %s67, 1
          %s215 = scalar_lea.sflag [#allocation4], %s214
          %s216 = sand.u32 %s67, 1
          %s217 = smul.addr %s216, 8
          %s218 = scalar_lea.vmem [#allocation5], %s217
          %220 = dma.done %s215, 128
        $region48: #{tpu_custom_call.1} parent=43 // pred_fallthru
          _
      $region44: #{tpu_custom_call.1} parent=5 // pred_fallthru
        _
    $region6: #{tpu_custom_call.1} parent=1 // loop_footer
      %s17 = sadd.s32 1, %s13
    $region7: #{tpu_custom_call.1} parent=1 // loop_footer_branch
      %12 = sbr.rel target = $region3
    $region8: #{tpu_custom_call.1} parent=1 // loop_exit
      _
    %221 = vsyncpa [#allocation3], 1
    %s222 = scalar_lea.sflag [#allocation3], 1
    %223 = vsyncpa %s222, 1
    %224 = vsyncpa [#allocation4], 1
    %s225 = scalar_lea.sflag [#allocation4], 1
    %226 = vsyncpa %s225, 1

</llo_original>
